<compile_context>
chip_gen: v5e
topology: v5e:2x2
jax: 0.10.0
libtpu: 0.0.40
codegen_flags: <defaults>
</compile_context>

<pallas_src>
import functools
import math

import jax
import jax.numpy as jnp
from jax import lax
from jax.experimental import pallas as pl
from jax.experimental.pallas import tpu as pltpu


def _round_up(n, m):
    return ((n + m - 1) // m) * m


def _self_attention_kernel(x_ref, wqkv_ref, bqkv_ref, o_ref, *,
                           seq_len, hp, recip_approx):
    # x_ref:    (Bt, S, Hp)   activations (compute dtype: f32 or bf16)
    # wqkv_ref: (Hp, 3*Hp)    fused, pre-transposed, pre-scaled QKV weights
    # bqkv_ref: (1, 3*Hp)     fused bias (f32)
    # o_ref:    (Bt, S, Hp)   output (padded hidden), f32
    bt = x_ref.shape[0]
    cdt = x_ref.dtype  # MXU operand dtype

    # --- Fused QKV projection: one (Bt*S, Hp) x (Hp, 3*Hp) MXU contraction.
    # (Bt, S, Hp) -> (Bt*S, Hp) is layout-preserving since S % 8 == 0. ---
    x2d = x_ref[...].reshape(bt * seq_len, hp)
    qkv = jnp.dot(x2d, wqkv_ref[...], preferred_element_type=jnp.float32)
    qkv = qkv + bqkv_ref[...]                      # single f32 bias broadcast

    # Lane-aligned (multiples of 128) static slices; q already carries the
    # 1/sqrt(H) scale (folded into the weights in the wrapper).
    q = qkv[:, 0 * hp:1 * hp].reshape(bt, seq_len, hp).astype(cdt)
    k = qkv[:, 1 * hp:2 * hp].reshape(bt, seq_len, hp).astype(cdt)
    v = qkv[:, 2 * hp:3 * hp].reshape(bt, seq_len, hp).astype(cdt)

    # --- scores[b] = q[b] @ k[b]^T, contracting the last dims (no explicit
    # transpose of k materialized). -> (Bt, S, S), f32 accumulation. ---
    scores = lax.dot_general(
        q, k,
        dimension_numbers=(((2,), (2,)), ((0,), (0,))),
        preferred_element_type=jnp.float32)

    # --- Numerically stable softmax; normalization deferred to the (S, Hp)
    # epilogue instead of rescaling the (S, S) matrix. ---
    m = jnp.max(scores, axis=-1, keepdims=True)
    p = jnp.exp(scores - m)
    denom = jnp.sum(p, axis=-1, keepdims=True)

    # (Dropout == identity in eval mode.)

    # --- out[b] = p[b] @ v[b]  -> (Bt, S, Hp), then normalize. ---
    out = lax.dot_general(
        p.astype(cdt), v,
        dimension_numbers=(((2,), (1,)), ((0,), (0,))),
        preferred_element_type=jnp.float32)
    out = out * pl.reciprocal(denom, approx=recip_approx)

    o_ref[...] = out.astype(o_ref.dtype)


def self_attention(x, wq, bq, wk, bk, wv, bv, *,
                   compute_dtype=jnp.bfloat16,
                   recip_approx=True,
                   block_b=None):
    """x: (B, S, H). W*: (H, H) PyTorch convention (y = x @ W^T + b). b*: (1, H)."""
    B, S, H = x.shape
    assert S % 8 == 0, "seq_len must be a multiple of 8 (sublane tiling)"

    Hp = _round_up(H, 128)                 # lane-dense padded hidden dim
    scale = 1.0 / math.sqrt(H)             # uses the TRUE hidden dim

    # --- Wrapper-side layout plumbing (done once; in a real model these fused
    # weights would be precomputed). Fold 1/sqrt(H) into the Q projection in
    # f32 before any cast; pre-transpose; zero-pad to (Hp, Hp); fuse Q|K|V. ---
    def pad_wt(wt):                        # (H, H) transposed -> (Hp, Hp)
        return jnp.pad(wt, ((0, Hp - H), (0, Hp - H)))

    def pad_b(b):                          # (1, H) -> (1, Hp)
        return jnp.pad(b, ((0, 0), (0, Hp - H)))

    wqkv = jnp.concatenate([pad_wt(wq.T * scale), pad_wt(wk.T), pad_wt(wv.T)],
                           axis=1)                      # (Hp, 3*Hp)
    bqkv = jnp.concatenate([pad_b(bq * scale), pad_b(bk), pad_b(bv)],
                           axis=1).astype(jnp.float32)  # (1, 3*Hp)

    xp = jnp.pad(x, ((0, 0), (0, 0), (0, Hp - H))).astype(compute_dtype)
    wqkv = wqkv.astype(compute_dtype)

    # --- Batch tiling: target ~128 rows (Bt*S) per projection matmul to fill
    # the MXU M dim and amortize per-grid-step overhead. ---
    if block_b is None:
        target = max(1, 128 // S)
        block_b = max((d for d in range(1, min(B, target) + 1) if B % d == 0),
                      default=1)
    assert B % block_b == 0

    kernel = functools.partial(_self_attention_kernel,
                               seq_len=S, hp=Hp, recip_approx=recip_approx)

    out_padded = pl.pallas_call(
        kernel,
        out_shape=jax.ShapeDtypeStruct((B, S, Hp), x.dtype),
        grid_spec=pltpu.PrefetchScalarGridSpec(
            num_scalar_prefetch=0,
            grid=(B // block_b,),
            in_specs=[
                pl.BlockSpec((block_b, S, Hp), lambda b: (b, 0, 0)),   # X
                # Grid-invariant blocks (constant index_map): not re-fetched
                # across batch steps.
                pl.BlockSpec((Hp, 3 * Hp), lambda b: (0, 0)),          # W_qkv^T
                pl.BlockSpec((1, 3 * Hp), lambda b: (0, 0)),           # b_qkv
            ],
            out_specs=pl.BlockSpec((block_b, S, Hp), lambda b: (b, 0, 0)),
        ),
        compiler_params=pltpu.CompilerParams(
            dimension_semantics=("parallel",),
            vmem_limit_bytes=48 * 1024 * 1024,
        ),
    )(xp, wqkv, bqkv)

    # Strip the hidden-dim padding (cheap XLA slice outside the kernel).
    return out_padded[..., :H]


def _reference(x, wq, bq, wk, bk, wv, bv):
    """Pure-JAX reference matching the PyTorch forward (eval mode)."""
    H = x.shape[-1]
    q = x @ wq.T + bq
    k = x @ wk.T + bk
    v = x @ wv.T + bv
    scores = (q @ jnp.swapaxes(k, -1, -2)) / math.sqrt(H)
    attn = jax.nn.softmax(scores, axis=-1)
    return attn @ v


if __name__ == "__main__":
    B, S, H = 2, 8, 32

    key = jax.random.PRNGKey(0)
    kx, kq, kbq, kk, kbk, kv, kbv = jax.random.split(key, 7)

    # Deterministic synthetic parameters (roughly PyTorch Linear init scale).
    bound = 1.0 / math.sqrt(H)
    x = jax.random.normal(kx, (B, S, H), dtype=jnp.float32)
    wq = jax.random.uniform(kq, (H, H), minval=-bound, maxval=bound, dtype=jnp.float32)
    bq = jax.random.uniform(kbq, (1, H), minval=-bound, maxval=bound, dtype=jnp.float32)
    wk = jax.random.uniform(kk, (H, H), minval=-bound, maxval=bound, dtype=jnp.float32)
    bk = jax.random.uniform(kbk, (1, H), minval=-bound, maxval=bound, dtype=jnp.float32)
    wv = jax.random.uniform(kv, (H, H), minval=-bound, maxval=bound, dtype=jnp.float32)
    bv = jax.random.uniform(kbv, (1, H), minval=-bound, maxval=bound, dtype=jnp.float32)

    ref = _reference(x, wq, bq, wk, bk, wv, bv)

    # f32 path: tight parity with the PyTorch module's eval-mode math.
    out_f32 = jax.block_until_ready(
        self_attention(x, wq, bq, wk, bk, wv, bv,
                       compute_dtype=jnp.float32, recip_approx=False))
    assert out_f32.shape == (B, S, H)
    assert jnp.allclose(out_f32, ref, atol=1e-5, rtol=1e-5), "f32 mismatch vs reference"

    # bf16 MXU path (default fast path): looser tolerance.
    out_bf16 = jax.block_until_ready(
        self_attention(x, wq, bq, wk, bk, wv, bv,
                       compute_dtype=jnp.bfloat16, recip_approx=True))
    assert out_bf16.shape == (B, S, H)
    assert jnp.allclose(out_bf16, ref, atol=2e-2, rtol=2e-2), "bf16 mismatch vs reference"

    print("KERNEL_OK")
</pallas_src>

<mosaic_0001>
module attributes {stable_mosaic.version = 11 : i64} {
  func.func @_self_attention_kernel(%arg0: i32, %arg1: memref<2x8x128xf32, #tpu.memory_space<vmem>>, %arg2: memref<128x384xf32, #tpu.memory_space<vmem>>, %arg3: memref<1x384xf32, #tpu.memory_space<vmem>>, %arg4: memref<2x8x128xf32, #tpu.memory_space<vmem>>) attributes {dimension_semantics = [#tpu.dimension_semantics<parallel>], iteration_bounds = array<i64: 1>, scalar_prefetch = 0 : i64, scratch_operands = 0 : i64, tpu.core_type = #tpu.core_type<tc>, window_params = [{transform_indices = @transform_0, window_bounds = array<i64: 2, 8, 128>}, {pipeline_mode = #tpu.pipeline_mode<synchronous>, transform_indices = @transform_1, window_bounds = array<i64: 128, 384>}, {pipeline_mode = #tpu.pipeline_mode<synchronous>, transform_indices = @transform_2, window_bounds = array<i64: 1, 384>}, {transform_indices = @transform_3, window_bounds = array<i64: 2, 8, 128>}]} {
    %c0 = arith.constant 0 : index
    %c0_0 = arith.constant 0 : index
    %c0_1 = arith.constant 0 : index
    %0 = vector.load %arg1[%c0, %c0_0, %c0_1] : memref<2x8x128xf32, #tpu.memory_space<vmem>>, vector<2x8x128xf32>
    %1 = vector.shape_cast %0 : vector<2x8x128xf32> to vector<16x128xf32>
    %c0_2 = arith.constant 0 : index
    %c0_3 = arith.constant 0 : index
    %2 = vector.load %arg2[%c0_2, %c0_3] : memref<128x384xf32, #tpu.memory_space<vmem>>, vector<128x384xf32>
    %cst = arith.constant dense<0.000000e+00> : vector<16x384xf32>
    %3 = tpu.matmul %1, %2, %cst {dimension_numbers = #tpu.dot_dimension_numbers<[1], [0], [0], [1], [0, 0, 1, 1], [], []>} : vector<16x128xf32>, vector<128x384xf32>, vector<16x384xf32> -> vector<16x384xf32>
    %c0_4 = arith.constant 0 : index
    %c0_5 = arith.constant 0 : index
    %4 = vector.load %arg3[%c0_4, %c0_5] : memref<1x384xf32, #tpu.memory_space<vmem>>, vector<1x384xf32>
    %5 = vector.broadcast %4 : vector<1x384xf32> to vector<16x384xf32>
    %6 = arith.addf %3, %5 : vector<16x384xf32>
    %7 = vector.extract_strided_slice %6 {offsets = [0, 0], sizes = [16, 128], strides = [1, 1]} : vector<16x384xf32> to vector<16x128xf32>
    %8 = vector.shape_cast %7 : vector<16x128xf32> to vector<2x8x128xf32>
    %9 = vector.extract_strided_slice %6 {offsets = [0, 128], sizes = [16, 128], strides = [1, 1]} : vector<16x384xf32> to vector<16x128xf32>
    %10 = vector.shape_cast %9 : vector<16x128xf32> to vector<2x8x128xf32>
    %11 = vector.extract_strided_slice %6 {offsets = [0, 256], sizes = [16, 128], strides = [1, 1]} : vector<16x384xf32> to vector<16x128xf32>
    %12 = vector.shape_cast %11 : vector<16x128xf32> to vector<2x8x128xf32>
    %cst_6 = arith.constant dense<0.000000e+00> : vector<2x8x8xf32>
    %13 = tpu.matmul %8, %10, %cst_6 {dimension_numbers = #tpu.dot_dimension_numbers<[2], [2], [1], [1], [0, 0, 0, 1, 1, 1], [0], [0]>} : vector<2x8x128xf32>, vector<2x8x128xf32>, vector<2x8x8xf32> -> vector<2x8x8xf32>
    %cst_7 = arith.constant dense<0xFF800000> : vector<2x8xf32>
    %14 = vector.multi_reduction <maximumf>, %13, %cst_7 [2] : vector<2x8x8xf32> to vector<2x8xf32>
    %15 = vector.shape_cast %14 : vector<2x8xf32> to vector<2x8x1xf32>
    %16 = vector.broadcast %15 : vector<2x8x1xf32> to vector<2x8x8xf32>
    %17 = arith.subf %13, %16 : vector<2x8x8xf32>
    %18 = math.exp %17 : vector<2x8x8xf32>
    %cst_8 = arith.constant dense<0.000000e+00> : vector<2x8xf32>
    %19 = vector.multi_reduction <add>, %18, %cst_8 [2] : vector<2x8x8xf32> to vector<2x8xf32>
    %20 = vector.shape_cast %19 : vector<2x8xf32> to vector<2x8x1xf32>
    %cst_9 = arith.constant dense<0.000000e+00> : vector<2x8x128xf32>
    %21 = tpu.matmul %18, %12, %cst_9 {dimension_numbers = #tpu.dot_dimension_numbers<[2], [1], [1], [2], [0, 0, 0, 1, 1, 2], [0], [0]>} : vector<2x8x8xf32>, vector<2x8x128xf32>, vector<2x8x128xf32> -> vector<2x8x128xf32>
    %22 = tpu.reciprocal %20 : vector<2x8x1xf32> -> vector<2x8x1xf32>
    %23 = vector.broadcast %22 : vector<2x8x1xf32> to vector<2x8x128xf32>
    %24 = arith.mulf %21, %23 : vector<2x8x128xf32>
    %c0_10 = arith.constant 0 : index
    %c0_11 = arith.constant 0 : index
    %c0_12 = arith.constant 0 : index
    %25 = vector.load %arg4[%c0_10, %c0_11, %c0_12] : memref<2x8x128xf32, #tpu.memory_space<vmem>>, vector<2x8x128xf32>
    tpu.vector_store %arg4[%c0_10, %c0_11, %c0_12], %24 {strides = array<i32>} : memref<2x8x128xf32, #tpu.memory_space<vmem>>, vector<2x8x128xf32>,
    return
  }
  func.func @transform_0(%arg0: i32) -> (i32, i32, i32) {
    %c0_i32 = arith.constant 0 : i32
    %c0_i32_0 = arith.constant 0 : i32
    %c0_i32_1 = arith.constant 0 : i32
    return %arg0, %c0_i32, %c0_i32_0 : i32, i32, i32
  }
  func.func @transform_1(%arg0: i32) -> (i32, i32) {
    %c0_i32 = arith.constant 0 : i32
    %c0_i32_0 = arith.constant 0 : i32
    %c0_i32_1 = arith.constant 0 : i32
    return %c0_i32, %c0_i32_0 : i32, i32
  }
  func.func @transform_2(%arg0: i32) -> (i32, i32) {
    %c0_i32 = arith.constant 0 : i32
    %c0_i32_0 = arith.constant 0 : i32
    %c0_i32_1 = arith.constant 0 : i32
    return %c0_i32, %c0_i32_0 : i32, i32
  }
  func.func @transform_3(%arg0: i32) -> (i32, i32, i32) {
    %c0_i32 = arith.constant 0 : i32
    %c0_i32_0 = arith.constant 0 : i32
    %c0_i32_1 = arith.constant 0 : i32
    return %arg0, %c0_i32, %c0_i32_0 : i32, i32, i32
  }
}

</mosaic_0001>

<llo_original>
// kernel: tpu_custom_call.1
$region0: #{tpu_custom_call.1}
  #allocation0 [shape = 'u32[]', space=smem, size = 0x4, offset = 0x4, fixed_abs, tag = 'smem constant byte address 0x4 - core index']
  #allocation1 [shape = 'u32[72,128]{1,0:T(1,128)}', space=vmem, size = 0x9000, scoped, tag = 'internal scratch']
  %s0 = inlined_call_operand.hbm [shape: f32[2,8,128], index: 0, kind: input, shape index: {}]
  %s1 = inlined_call_operand.hbm [shape: f32[128,384], index: 1, kind: input, shape index: {}]
  %s2 = inlined_call_operand.hbm [shape: f32[1,384], index: 2, kind: input, shape index: {}]
  %s3 = inlined_call_operand.hbm [shape: f32[2,8,128], index: 3, kind: output, shape index: {}]
  %s4 = sld [smem:[#allocation0]]
  $region34: #{tpu_custom_call.1} parent=0
    _
  %s6 = ssub.s32 1, %s4
  %s7 = scalar_select 0, %s6, %s4
  $region1: #{tpu_custom_call.1} parent=0
    #allocation2 [shape = 'u8[8192]{0}', space=vmem, size = 0x2000, scoped, tag = 'input window, operand 0, single buffered']
    #allocation3 [shape = 's32[1]{0}', space=sflag, size = 0x4, scoped, tag = 'scoped memory for tpu_custom_call.1']
    #allocation4 [shape = 's32[1]{0}', space=sflag, size = 0x4, scoped, tag = 'scoped memory for tpu_custom_call.1']
    #allocation5 [shape = 'u8[196608]{0}', space=vmem, size = 0x30000, scoped, tag = 'input window, operand 1, single buffered']
    #allocation6 [shape = 's32[1]{0}', space=sflag, size = 0x4, scoped, tag = 'scoped memory for tpu_custom_call.1']
    #allocation7 [shape = 'u8[1536]{0}', space=vmem, size = 0x800, scoped, tag = 'input window, operand 2, single buffered']
    #allocation8 [shape = 'u8[8192]{0}', space=vmem, size = 0x2000, scoped, tag = 'output window, operand 0, single buffered']
    %8 = vsyncpa [#allocation3], 0
    %9 = vsyncpa [#allocation6], 0
    %10 = vsyncpa [#allocation4], 0
    // Predicated region
    $region2: #{tpu_custom_call.1} parent=1 // pred_check
      _
    $region3: #{tpu_custom_call.1} parent=1 // pred_check_branch
      %12 = sbr.rel (0) target = $region5
    $region4: #{tpu_custom_call.1} parent=1 // pred_region
      %14 = vsyncadd [#allocation3], 0
      %s15 = sshll.u32 %s0, 4
      %s16 = int_to_ptr.hbm [resolvable:$true] %s15
      %s17 = sshll.u32 [#allocation2], 4
      %s18 = int_to_ptr.vmem [resolvable:$true] %s17
      %23 = dma.hbm_to_vmem [thread:$0]  %s16, 256, %s18, [#allocation3], 128, 128, 8
    $region5: #{tpu_custom_call.1} parent=1 // pred_fallthru
      _
    // Predicated region
    $region6: #{tpu_custom_call.1} parent=1 // pred_check
      _
    $region7: #{tpu_custom_call.1} parent=1 // pred_check_branch
      %25 = sbr.rel (0) target = $region9
    $region8: #{tpu_custom_call.1} parent=1 // pred_region
      %27 = vsyncadd [#allocation6], 0
      %s28 = sshll.u32 %s1, 4
      %s29 = int_to_ptr.hbm [resolvable:$true] %s28
      %s30 = sshll.u32 [#allocation5], 4
      %s31 = int_to_ptr.vmem [resolvable:$true] %s30
      %36 = dma.hbm_to_vmem [thread:$0]  %s29, 6144, %s31, [#allocation6], 384, 384, 24
    $region9: #{tpu_custom_call.1} parent=1 // pred_fallthru
      _
    // Predicated region
    $region10: #{tpu_custom_call.1} parent=1 // pred_check
      _
    $region11: #{tpu_custom_call.1} parent=1 // pred_check_branch
      %38 = sbr.rel (0) target = $region13
    $region12: #{tpu_custom_call.1} parent=1 // pred_region
      %40 = vsyncadd [#allocation6], 0
      %s42 = sshll.u32 %s2, 4
      %s43 = int_to_ptr.hbm [resolvable:$true] %s42
      %s44 = sshll.u32 [#allocation7], 4
      %s45 = int_to_ptr.vmem [resolvable:$true] %s44
      %47 = dma.hbm_to_vmem [thread:$0]  %s43, 48, %s45, [#allocation6]
    $region13: #{tpu_custom_call.1} parent=1 // pred_fallthru
      _
    // Predicated region
    $region14: #{tpu_custom_call.1} parent=1 // pred_check
      _
    $region15: #{tpu_custom_call.1} parent=1 // pred_check_branch
      %49 = sbr.rel (0) target = $region17
    $region16: #{tpu_custom_call.1} parent=1 // pred_region
      %51 = dma.done [#allocation3], 256
    $region17: #{tpu_custom_call.1} parent=1 // pred_fallthru
      _
    // Predicated region
    $region18: #{tpu_custom_call.1} parent=1 // pred_check
      _
    $region19: #{tpu_custom_call.1} parent=1 // pred_check_branch
      %53 = sbr.rel (0) target = $region21
    $region20: #{tpu_custom_call.1} parent=1 // pred_region
      %55 = dma.done [#allocation6], 6144
    $region21: #{tpu_custom_call.1} parent=1 // pred_fallthru
      _
    // Predicated region
    $region22: #{tpu_custom_call.1} parent=1 // pred_check
      _
    $region23: #{tpu_custom_call.1} parent=1 // pred_check_branch
      %57 = sbr.rel (0) target = $region25
    $region24: #{tpu_custom_call.1} parent=1 // pred_region
      %59 = dma.done [#allocation6], 48
    $region25: #{tpu_custom_call.1} parent=1 // pred_fallthru
      _
    %v60 = vld [vmem:[#allocation2] sm:$0xff]
    %v61 = vld [vmem:[#allocation2 + $0x8] sm:$0xff]
    %v62 = vld [vmem:[#allocation5] sm:$0xff]
    %v63 = vld [vmem:[#allocation5 + $0x8] sm:$0xff]
    %v64 = vld [vmem:[#allocation5 + $0x10] sm:$0xff]
    %v65 = vld [vmem:[#allocation5 + $0x18] sm:$0xff]
    %v66 = vld [vmem:[#allocation5 + $0x20] sm:$0xff]
    %v67 = vld [vmem:[#allocation5 + $0x28] sm:$0xff]
    %v68 = vld [vmem:[#allocation5 + $0x30] sm:$0xff]
    %v69 = vld [vmem:[#allocation5 + $0x38] sm:$0xff]
    %v70 = vld [vmem:[#allocation5 + $0x40] sm:$0xff]
    %v71 = vld [vmem:[#allocation5 + $0x48] sm:$0xff]
    %v72 = vld [vmem:[#allocation5 + $0x50] sm:$0xff]
    %v73 = vld [vmem:[#allocation5 + $0x58] sm:$0xff]
    %v74 = vld [vmem:[#allocation5 + $0x60] sm:$0xff]
    %v75 = vld [vmem:[#allocation5 + $0x68] sm:$0xff]
    %v76 = vld [vmem:[#allocation5 + $0x70] sm:$0xff]
    %v77 = vld [vmem:[#allocation5 + $0x78] sm:$0xff]
    %v78 = vld [vmem:[#allocation5 + $0x80] sm:$0xff]
    %v79 = vld [vmem:[#allocation5 + $0x88] sm:$0xff]
    %v80 = vld [vmem:[#allocation5 + $0x90] sm:$0xff]
    %v81 = vld [vmem:[#allocation5 + $0x98] sm:$0xff]
    %v82 = vld [vmem:[#allocation5 + $0xa0] sm:$0xff]
    %v83 = vld [vmem:[#allocation5 + $0xa8] sm:$0xff]
    %v84 = vld [vmem:[#allocation5 + $0xb0] sm:$0xff]
    %v85 = vld [vmem:[#allocation5 + $0xb8] sm:$0xff]
    %v86 = vld [vmem:[#allocation5 + $0xc0] sm:$0xff]
    %v87 = vld [vmem:[#allocation5 + $0xc8] sm:$0xff]
    %v88 = vld [vmem:[#allocation5 + $0xd0] sm:$0xff]
    %v89 = vld [vmem:[#allocation5 + $0xd8] sm:$0xff]
    %v90 = vld [vmem:[#allocation5 + $0xe0] sm:$0xff]
    %v91 = vld [vmem:[#allocation5 + $0xe8] sm:$0xff]
    %v92 = vld [vmem:[#allocation5 + $0xf0] sm:$0xff]
    %v93 = vld [vmem:[#allocation5 + $0xf8] sm:$0xff]
    %v94 = vld [vmem:[#allocation5 + $0x100] sm:$0xff]
    %v95 = vld [vmem:[#allocation5 + $0x108] sm:$0xff]
    %v96 = vld [vmem:[#allocation5 + $0x110] sm:$0xff]
    %v97 = vld [vmem:[#allocation5 + $0x118] sm:$0xff]
    %v98 = vld [vmem:[#allocation5 + $0x120] sm:$0xff]
    %v99 = vld [vmem:[#allocation5 + $0x128] sm:$0xff]
    %v100 = vld [vmem:[#allocation5 + $0x130] sm:$0xff]
    %v101 = vld [vmem:[#allocation5 + $0x138] sm:$0xff]
    %v102 = vld [vmem:[#allocation5 + $0x140] sm:$0xff]
    %v103 = vld [vmem:[#allocation5 + $0x148] sm:$0xff]
    %v104 = vld [vmem:[#allocation5 + $0x150] sm:$0xff]
    %v105 = vld [vmem:[#allocation5 + $0x158] sm:$0xff]
    %v106 = vld [vmem:[#allocation5 + $0x160] sm:$0xff]
    %v107 = vld [vmem:[#allocation5 + $0x168] sm:$0xff]
    %v108 = vld [vmem:[#allocation5 + $0x170] sm:$0xff]
    %v109 = vld [vmem:[#allocation5 + $0x178] sm:$0xff]
    %v110 = vld [vmem:[#allocation7] sm:$0x7]
    %v112 = vperm.slane %v110, 0
    %v113 = vperm.slane %v110, 1
    %v114 = vperm.slane %v110, 2
    %118 = vmatpush.msra.mxu0 %v107
    %119 = vmatpush.msra.mxu0 %v104
    %120 = vmatpush.msra.mxu0 %v101
    %121 = vmatpush.msra.mxu0 %v98
    %122 = vmatpush.msra.mxu0 %v95
    %123 = vmatpush.msra.mxu0 %v92
    %124 = vmatpush.msra.mxu0 %v89
    %125 = vmatpush.msra.mxu0 %v86
    %126 = vmatpush.msra.mxu0 %v83
    %127 = vmatpush.msra.mxu0 %v80
    %128 = vmatpush.msra.mxu0 %v77
    %129 = vmatpush.msra.mxu0 %v74
    %130 = vmatpush.msra.mxu0 %v71
    %131 = vmatpush.msra.mxu0 %v68
    %132 = vmatpush.msra.mxu0 %v65
    %133 = vmatpush.msra.mxu0 %v62
    %134 = vmatmul.f32.gmra.mxu0 %v60
    %v135 = vpop.f32.mrf.mxu0
    %v136 = vadd.f32 %v112, %v135
    %137 = vmatmul.f32.gmra.mxu0 %v61
    %v138 = vpop.f32.mrf.mxu0
    %v139 = vadd.f32 %v112, %v138
    %140 = vdwg.mxu0
    %141 = vmatpush.msra.mxu0 %v108
    %142 = vmatpush.msra.mxu0 %v105
    %143 = vmatpush.msra.mxu0 %v102
    %144 = vmatpush.msra.mxu0 %v99
    %145 = vmatpush.msra.mxu0 %v96
    %146 = vmatpush.msra.mxu0 %v93
    %147 = vmatpush.msra.mxu0 %v90
    %148 = vmatpush.msra.mxu0 %v87
    %149 = vmatpush.msra.mxu0 %v84
    %150 = vmatpush.msra.mxu0 %v81
    %151 = vmatpush.msra.mxu0 %v78
    %152 = vmatpush.msra.mxu0 %v75
    %153 = vmatpush.msra.mxu0 %v72
    %154 = vmatpush.msra.mxu0 %v69
    %155 = vmatpush.msra.mxu0 %v66
    %156 = vmatpush.msra.mxu0 %v63
    %157 = vmatmul.f32.gmra.mxu0 %v60
    %v158 = vpop.f32.mrf.mxu0
    %v159 = vadd.f32 %v113, %v158
    %160 = vmatmul.f32.gmra.mxu0 %v61
    %v161 = vpop.f32.mrf.mxu0
    %v162 = vadd.f32 %v113, %v161
    %163 = vdwg.mxu0
    %164 = vmatpush.msra.mxu0 %v109
    %165 = vmatpush.msra.mxu0 %v106
    %166 = vmatpush.msra.mxu0 %v103
    %167 = vmatpush.msra.mxu0 %v100
    %168 = vmatpush.msra.mxu0 %v97
    %169 = vmatpush.msra.mxu0 %v94
    %170 = vmatpush.msra.mxu0 %v91
    %171 = vmatpush.msra.mxu0 %v88
    %172 = vmatpush.msra.mxu0 %v85
    %173 = vmatpush.msra.mxu0 %v82
    %174 = vmatpush.msra.mxu0 %v79
    %175 = vmatpush.msra.mxu0 %v76
    %176 = vmatpush.msra.mxu0 %v73
    %177 = vmatpush.msra.mxu0 %v70
    %178 = vmatpush.msra.mxu0 %v67
    %179 = vmatpush.msra.mxu0 %v64
    %180 = vmatmul.f32.gmra.mxu0 %v60
    %v181 = vpop.f32.mrf.mxu0
    %v182 = vadd.f32 %v114, %v181
    %183 = vmatmul.f32.gmra.mxu0 %v61
    %v184 = vpop.f32.mrf.mxu0
    %v185 = vadd.f32 %v114, %v184
    %186 = vdwg.mxu0
    %187 = vmatpush.xpose.msra.mxu0 0.0
    %188 = vmatpush.xpose.msra.mxu0 0.0
    %189 = vmatpush.xpose.msra.mxu0 0.0
    %190 = vmatpush.xpose.msra.mxu0 0.0
    %191 = vmatpush.xpose.msra.mxu0 0.0
    %192 = vmatpush.xpose.msra.mxu0 0.0
    %193 = vmatpush.xpose.msra.mxu0 0.0
    %194 = vmatpush.xpose.msra.mxu0 0.0
    %195 = vmatpush.xpose.msra.mxu0 0.0
    %196 = vmatpush.xpose.msra.mxu0 0.0
    %197 = vmatpush.xpose.msra.mxu0 0.0
    %198 = vmatpush.xpose.msra.mxu0 0.0
    %199 = vmatpush.xpose.msra.mxu0 0.0
    %200 = vmatpush.xpose.msra.mxu0 0.0
    %201 = vmatpush.xpose.msra.mxu0 0.0
    %202 = vmatpush.xpose.msra.mxu0 %v159
    %203 = vmatmul.f32.gmra.mxu0 %v136
    %v204 = vpop.f32.mrf.mxu0
    %v205 = vadd.f32 0.0, %v204
    %206 = vdwg.mxu0
    %207 = vmatpush.xpose.msra.mxu0 0.0
    %208 = vmatpush.xpose.msra.mxu0 0.0
    %209 = vmatpush.xpose.msra.mxu0 0.0
    %210 = vmatpush.xpose.msra.mxu0 0.0
    %211 = vmatpush.xpose.msra.mxu0 0.0
    %212 = vmatpush.xpose.msra.mxu0 0.0
    %213 = vmatpush.xpose.msra.mxu0 0.0
    %214 = vmatpush.xpose.msra.mxu0 0.0
    %215 = vmatpush.xpose.msra.mxu0 0.0
    %216 = vmatpush.xpose.msra.mxu0 0.0
    %217 = vmatpush.xpose.msra.mxu0 0.0
    %218 = vmatpush.xpose.msra.mxu0 0.0
    %219 = vmatpush.xpose.msra.mxu0 0.0
    %220 = vmatpush.xpose.msra.mxu0 0.0
    %221 = vmatpush.xpose.msra.mxu0 0.0
    %222 = vmatpush.xpose.msra.mxu0 %v162
    %223 = vmatmul.f32.gmra.mxu0 %v139
    %v224 = vpop.f32.mrf.mxu0
    %v225 = vadd.f32 0.0, %v224
    %226 = vdwg.mxu0
    %vm227 = vcmask 64512
    %v228 = vsel %vm227, %v205, -inf
    %229 = vmax.xlane.f32.xlu0 %v228
    %v230 = vpop.xlane.xlu0 %229
    %v231 = vsel %vm227, %v225, -inf
    %232 = vmax.xlane.f32.xlu0 %v231
    %v233 = vpop.xlane.xlu0 %232
    %v234 = vsub.f32 %v205, %v230
    %v235 = vsub.f32 %v225, %v233
    %v236 = vmul.f32 %v234, 1.442695
    %v237 = vpow.pop %v236
    %v238 = vmul.f32 %v235, 1.442695
    %v239 = vpow.pop %v238
    %v240 = vsel %vm227, %v237, 0.0
    %241 = vadd.xlane.f32.xlu0 %v240
    %v242 = vpop.xlane.xlu0 %241
    %v243 = vsel %vm227, %v239, 0.0
    %244 = vadd.xlane.f32.xlu0 %v243
    %v245 = vpop.xlane.xlu0 %244
    %v247 = vsel %vm227, %v237, 0
    %249 = vmatpush.msra.mxu0 0.0
    %250 = vmatpush.msra.mxu0 0.0
    %251 = vmatpush.msra.mxu0 0.0
    %252 = vmatpush.msra.mxu0 0.0
    %253 = vmatpush.msra.mxu0 0.0
    %254 = vmatpush.msra.mxu0 0.0
    %255 = vmatpush.msra.mxu0 0.0
    %256 = vmatpush.msra.mxu0 0.0
    %257 = vmatpush.msra.mxu0 0.0
    %258 = vmatpush.msra.mxu0 0.0
    %259 = vmatpush.msra.mxu0 0.0
    %260 = vmatpush.msra.mxu0 0.0
    %261 = vmatpush.msra.mxu0 0.0
    %262 = vmatpush.msra.mxu0 0.0
    %263 = vmatpush.msra.mxu0 0.0
    %264 = vmatpush.msra.mxu0 %v182
    %265 = vmatmul.f32.gmra.mxu0 %v247
    %v266 = vpop.f32.mrf.mxu0
    %v267 = vadd.f32 0.0, %v266
    %268 = vdwg.mxu0
    %v270 = vsel %vm227, %v239, 0
    %272 = vmatpush.msra.mxu0 0.0
    %273 = vmatpush.msra.mxu0 0.0
    %274 = vmatpush.msra.mxu0 0.0
    %275 = vmatpush.msra.mxu0 0.0
    %276 = vmatpush.msra.mxu0 0.0
    %277 = vmatpush.msra.mxu0 0.0
    %278 = vmatpush.msra.mxu0 0.0
    %279 = vmatpush.msra.mxu0 0.0
    %280 = vmatpush.msra.mxu0 0.0
    %281 = vmatpush.msra.mxu0 0.0
    %282 = vmatpush.msra.mxu0 0.0
    %283 = vmatpush.msra.mxu0 0.0
    %284 = vmatpush.msra.mxu0 0.0
    %285 = vmatpush.msra.mxu0 0.0
    %286 = vmatpush.msra.mxu0 0.0
    %287 = vmatpush.msra.mxu0 %v185
    %288 = vmatmul.f32.gmra.mxu0 %v270
    %v289 = vpop.f32.mrf.mxu0
    %v290 = vadd.f32 0.0, %v289
    %291 = vdwg.mxu0
    %v292 = vrcp.pop %v242
    %v293 = vmul.f32 %v242, %v292
    %v294 = vsub.f32 1.0, %v293
    %v295 = vmul.f32 %v292, %v294
    %v296 = vadd.f32 %v292, %v295
    %vm297 = vweird.f32 %v242
    %vm298 = vweird.f32 %v292
    %vm299 = vmor %vm297, %vm298
    %v300 = vsel %vm299, %v292, %v296
    %v301 = vand.u32 2147483647, %v242
    %vm302 = vcmp.eq.f32.partialorder %v301, 8.507059e+37
    %v303 = vand.u32 %v242, 2147483648
    %v304 = vor.u32 1.1754944e-38, %v303
    %v305 = vsel %vm302, %v304, %v300
    %v306 = vrcp.pop %v245
    %v307 = vmul.f32 %v245, %v306
    %v308 = vsub.f32 1.0, %v307
    %v309 = vmul.f32 %v306, %v308
    %v310 = vadd.f32 %v306, %v309
    %vm311 = vweird.f32 %v245
    %vm312 = vweird.f32 %v306
    %vm313 = vmor %vm311, %vm312
    %v314 = vsel %vm313, %v306, %v310
    %v315 = vand.u32 2147483647, %v245
    %vm316 = vcmp.eq.f32.partialorder %v315, 8.507059e+37
    %v317 = vand.u32 %v245, 2147483648
    %v318 = vor.u32 1.1754944e-38, %v317
    %v319 = vsel %vm316, %v318, %v314
    %v320 = vmul.f32 %v267, %v305
    %v321 = vmul.f32 %v290, %v319
    %322 = vst [vmem:[#allocation8] sm:$0xff] %v320
    %323 = vst [vmem:[#allocation8 + $0x8] sm:$0xff] %v321
    // Predicated region
    $region26: #{tpu_custom_call.1} parent=1 // pred_check
      _
    $region27: #{tpu_custom_call.1} parent=1 // pred_check_branch
      %325 = sbr.rel (0) target = $region29
    $region28: #{tpu_custom_call.1} parent=1 // pred_region
      %327 = vsyncadd [#allocation4], 0
      %s328 = sshll.u32 [#allocation8], 4
      %s329 = int_to_ptr.vmem [resolvable:$true] %s328
      %s330 = sshll.u32 %s3, 4
      %s331 = int_to_ptr.hbm [resolvable:$true] %s330
      %336 = dma.vmem_to_hbm [thread:$0]  %s329, 256, %s331, [#allocation4], 128, 128, 8
    $region29: #{tpu_custom_call.1} parent=1 // pred_fallthru
      _
    // Predicated region
    $region30: #{tpu_custom_call.1} parent=1 // pred_check
      _
    $region31: #{tpu_custom_call.1} parent=1 // pred_check_branch
      %338 = sbr.rel (0) target = $region33
    $region32: #{tpu_custom_call.1} parent=1 // pred_region
      %340 = dma.done [#allocation4], 256
    $region33: #{tpu_custom_call.1} parent=1 // pred_fallthru
      _
    %341 = vsyncpa [#allocation3], 1
    %342 = vsyncpa [#allocation6], 1
    %343 = vsyncpa [#allocation4], 1

</llo_original>
